<compile_context>
chip_gen: v5e
topology: v5e:2x2
jax: 0.10.0
libtpu: 0.0.40
codegen_flags: <defaults>
</compile_context>

<pallas_src>
import jax
import jax.numpy as jnp
import numpy as np
from jax import lax
from jax.experimental import pallas as pl
from jax.experimental.pallas import tpu as pltpu


def _alpha_cov_kernel(scal_ref, alpha_sm_ref, alpha_col_ref, x_ref, c_ref,
                      y_ref, sigma_ref, out_ref):
    # SMEM scalars: [W, non_convex_part_weight, diag_part_weight, log_coeff,
    #                1/sum(X*X), 1/sum(Y*Y)]
    W = scal_ref[0]
    ncw = scal_ref[1]
    dpw = scal_ref[2]
    logc = scal_ref[3]
    inv_xx = scal_ref[4]
    inv_yy = scal_ref[5]

    alpha_col = alpha_col_ref[...]                     # (K, 1)
    C = c_ref[...]                                     # (K, M)
    K = C.shape[0]

    # diag(alpha) @ C, and alpha @ C as its sublane reduction (no C^T input).
    scaled_C = alpha_col * C                           # (K, M)
    aC = jnp.sum(scaled_C, axis=0, keepdims=True)      # (1, M) == alpha @ C

    # ---- first moment term ----
    # C.repeat(1, B) tiling in torch == broadcasting aC over the B rows of X.
    diff = x_ref[...] - aC                             # (B, M)
    first = jnp.sum(diff * diff, keepdims=True) * inv_xx          # (1, 1)

    # ---- second moment term ----
    # (ncw/sum_alpha)*outer - dpw*CdC fused into one (M,K)@(K,M) MXU matmul:
    #   G = (diag(alpha) C)^T @ D  with  D[k,:] = (ncw/s)*aC - dpw*C[k,:]
    # (scalar weights folded into the small (K,M) operand, not the (M,M) result)
    sum_alpha = jnp.sum(alpha_col, keepdims=True)      # (1, 1)
    coef = ncw / sum_alpha                             # (1, 1)
    D = coef * aC - dpw * C                            # (K, M)
    G = lax.dot_general(scaled_C, D, (((0,), (0,)), ((), ())),
                        preferred_element_type=jnp.float32)       # (M, M)

    # alpha @ Sigma folded straight into the residual: unrolled K-step FMA with
    # SMEM scalar weights (no VMEM alpha slice + broadcast per k).
    def body(k, r):
        return r - alpha_sm_ref[k] * sigma_ref[k]
    resid = lax.fori_loop(0, K, body, y_ref[...] + G, unroll=True)  # (M, M)

    second = jnp.sum(resid * resid, keepdims=True) * inv_yy        # (1, 1)

    # optional log-barrier term (use_projected_gradient=False); logc==0 disables
    log_term = logc * jnp.sum(jnp.log(alpha_col + 1e-6), keepdims=True)

    out_ref[...] = (1.0 - W) * first + W * second + log_term       # (1, 1)


def alpha_cov_loss(alpha, X, C, Y, Sigma, W, non_convex_part_weight,
                   diag_part_weight, epoch, use_projected_gradient=True):
    B, M = X.shape
    K = C.shape[0]
    assert C.shape == (K, M) and Y.shape == (M, M) and Sigma.shape == (K, M * M)
    assert alpha.shape == (1, K)

    alpha = alpha.astype(jnp.float32)
    X = X.astype(jnp.float32)
    C = C.astype(jnp.float32)
    Y = Y.astype(jnp.float32)
    Sigma3 = Sigma.astype(jnp.float32).reshape(K, M, M)   # free row-major view
    alpha_col = alpha.reshape(K, 1)                       # tiny glue
    alpha_vec = alpha.reshape(K)                          # SMEM scalar copy

    logc = 0.0 if use_projected_gradient else -1.0 / float(epoch + 1) ** 2
    # Hoisted constant denominators (constants w.r.t. alpha).
    inv_xx = (1.0 / jnp.sum(X * X)).astype(jnp.float32).reshape(1)
    inv_yy = (1.0 / jnp.sum(Y * Y)).astype(jnp.float32).reshape(1)
    scal = jnp.concatenate([
        jnp.array([W, non_convex_part_weight, diag_part_weight, logc],
                  dtype=jnp.float32),
        inv_xx, inv_yy])

    # Explicit VMEM budget sized from actual operand bytes (+ headroom for the
    # (M,M) intermediates), capped at v7x's 64 MiB physical ceiling.
    op_bytes = 4 * (alpha_col.size + X.size + C.size + Y.size + Sigma3.size + 1)
    scratch_bytes = 4 * (3 * M * M + 2 * K * M + B * M + 256)
    vmem_limit = int(min(64 * 1024 * 1024,
                         max(4 * 1024 * 1024, 2 * (op_bytes + scratch_bytes))))

    smem = pltpu.MemorySpace.SMEM
    vmem = pltpu.MemorySpace.VMEM
    out = pl.pallas_call(
        _alpha_cov_kernel,
        out_shape=jax.ShapeDtypeStruct((1, 1), jnp.float32),
        in_specs=[
            pl.BlockSpec(memory_space=smem),   # scalars (6,)
            pl.BlockSpec(memory_space=smem),   # alpha  (K,)  scalar reads
            pl.BlockSpec(memory_space=vmem),   # alpha  (K, 1)
            pl.BlockSpec(memory_space=vmem),   # X      (B, M)
            pl.BlockSpec(memory_space=vmem),   # C      (K, M)
            pl.BlockSpec(memory_space=vmem),   # Y      (M, M)
            pl.BlockSpec(memory_space=vmem),   # Sigma  (K, M, M)
        ],
        out_specs=pl.BlockSpec(memory_space=vmem),
        compiler_params=pltpu.CompilerParams(vmem_limit_bytes=vmem_limit),
    )(scal, alpha_vec, alpha_col, X, C, Y, Sigma3)
    return out[0, 0]


def reference_loss(alpha, X, C, Y, Sigma, W, ncw, dpw, epoch,
                   use_projected_gradient=True):
    # Direct numpy transcription of the torch forward (float32).
    alpha = np.asarray(alpha, np.float32)
    X = np.asarray(X, np.float32)
    C = np.asarray(C, np.float32)
    Y = np.asarray(Y, np.float32)
    Sigma = np.asarray(Sigma, np.float32)
    B = X.shape[0]
    C_rep = np.tile(C, (1, B))
    xf = X.reshape(-1)
    first = np.sum((xf - alpha @ C_rep) ** 2) / (xf @ xf)
    diag_alpha = np.diag(alpha.reshape(-1))
    aC = alpha @ C
    yf = Y.reshape(-1)
    second = np.sum((yf
                     + ncw / np.sum(alpha) * (aC.T @ alpha @ C).reshape(-1)
                     - alpha @ Sigma
                     - dpw * (C.T @ diag_alpha @ C).reshape(-1)) ** 2) / (yf @ yf)
    loss = (1.0 - W) * first + W * second
    if not use_projected_gradient:
        loss += -1.0 / (epoch + 1) ** 2 * np.sum(np.log(alpha + 1e-6))
    return np.float32(loss)


if __name__ == "__main__":
    key = jax.random.PRNGKey(0)
    k1, k2, k3, k4, k5 = jax.random.split(key, 5)

    B, K, M = 2, 4, 16            # batch, n_clusters, feature dim
    # deterministic parameter init, mirrors torch.rand(1, n_clusters) * 0.01
    alpha = jax.random.uniform(k1, (1, K), jnp.float32) * 0.01
    X = jax.random.normal(k2, (B, M), jnp.float32)
    C = jax.random.normal(k3, (K, M), jnp.float32)
    Yh = jax.random.normal(k4, (M, M), jnp.float32)
    Y = Yh @ Yh.T / M
    Sigma = jax.random.normal(k5, (K, M * M), jnp.float32)

    W, ncw, dpw, epoch = 0.5, 0.3, 0.2, 3

    # Path 1: use_projected_gradient=True (no log barrier)
    loss = alpha_cov_loss(alpha, X, C, Y, Sigma, W, ncw, dpw, epoch,
                          use_projected_gradient=True)
    loss = jax.block_until_ready(loss)
    ref = reference_loss(np.array(alpha), np.array(X), np.array(C),
                         np.array(Y), np.array(Sigma), W, ncw, dpw, epoch,
                         use_projected_gradient=True)
    np.testing.assert_allclose(np.array(loss), ref, rtol=2e-3, atol=1e-4)

    # Path 2: use_projected_gradient=False (log-barrier enabled)
    loss2 = alpha_cov_loss(alpha, X, C, Y, Sigma, W, ncw, dpw, epoch,
                           use_projected_gradient=False)
    loss2 = jax.block_until_ready(loss2)
    ref2 = reference_loss(np.array(alpha), np.array(X), np.array(C),
                          np.array(Y), np.array(Sigma), W, ncw, dpw, epoch,
                          use_projected_gradient=False)
    np.testing.assert_allclose(np.array(loss2), ref2, rtol=2e-3, atol=1e-3)

    print("KERNEL_OK")
</pallas_src>

<mosaic_0001>
module attributes {stable_mosaic.version = 11 : i64} {
  func.func @_alpha_cov_kernel(%arg0: memref<6xf32, #tpu.memory_space<smem>>, %arg1: memref<4xf32, #tpu.memory_space<smem>>, %arg2: memref<4x1xf32, #tpu.memory_space<vmem>>, %arg3: memref<2x16xf32, #tpu.memory_space<vmem>>, %arg4: memref<4x16xf32, #tpu.memory_space<vmem>>, %arg5: memref<16x16xf32, #tpu.memory_space<vmem>>, %arg6: memref<4x16x16xf32, #tpu.memory_space<vmem>>, %arg7: memref<1x1xf32, #tpu.memory_space<vmem>>) attributes {dimension_semantics = [], scalar_prefetch = 0 : i64, scratch_operands = 0 : i64, tpu.core_type = #tpu.core_type<tc>} {
    %c0 = arith.constant 0 : index
    %0 = memref.load %arg0[%c0] : memref<6xf32, #tpu.memory_space<smem>>
    %c1 = arith.constant 1 : index
    %1 = memref.load %arg0[%c1] : memref<6xf32, #tpu.memory_space<smem>>
    %c2 = arith.constant 2 : index
    %2 = memref.load %arg0[%c2] : memref<6xf32, #tpu.memory_space<smem>>
    %c3 = arith.constant 3 : index
    %3 = memref.load %arg0[%c3] : memref<6xf32, #tpu.memory_space<smem>>
    %c4 = arith.constant 4 : index
    %4 = memref.load %arg0[%c4] : memref<6xf32, #tpu.memory_space<smem>>
    %c5 = arith.constant 5 : index
    %5 = memref.load %arg0[%c5] : memref<6xf32, #tpu.memory_space<smem>>
    %c0_0 = arith.constant 0 : index
    %c0_1 = arith.constant 0 : index
    %6 = vector.load %arg2[%c0_0, %c0_1] : memref<4x1xf32, #tpu.memory_space<vmem>>, vector<4x1xf32>
    %c0_2 = arith.constant 0 : index
    %c0_3 = arith.constant 0 : index
    %7 = vector.load %arg4[%c0_2, %c0_3] : memref<4x16xf32, #tpu.memory_space<vmem>>, vector<4x16xf32>
    %8 = vector.broadcast %6 : vector<4x1xf32> to vector<4x16xf32>
    %9 = arith.mulf %8, %7 : vector<4x16xf32>
    %cst = arith.constant dense<0.000000e+00> : vector<16xf32>
    %10 = vector.multi_reduction <add>, %9, %cst [0] : vector<4x16xf32> to vector<16xf32>
    %11 = vector.shape_cast %10 : vector<16xf32> to vector<1x16xf32>
    %c0_4 = arith.constant 0 : index
    %c0_5 = arith.constant 0 : index
    %12 = vector.load %arg3[%c0_4, %c0_5] : memref<2x16xf32, #tpu.memory_space<vmem>>, vector<2x16xf32>
    %13 = vector.broadcast %11 : vector<1x16xf32> to vector<2x16xf32>
    %14 = arith.subf %12, %13 : vector<2x16xf32>
    %15 = arith.mulf %14, %14 : vector<2x16xf32>
    %16 = vector.shape_cast %15 : vector<2x16xf32> to vector<1x2x16xf32>
    %cst_6 = arith.constant dense<0.000000e+00> : vector<1xf32>
    %17 = vector.multi_reduction <add>, %16, %cst_6 [1, 2] : vector<1x2x16xf32> to vector<1xf32>
    %18 = vector.shape_cast %17 : vector<1xf32> to vector<1x1x1xf32>
    %19 = vector.extract %18[0, 0, 0] : f32 from vector<1x1x1xf32>
    %20 = vector.broadcast %19 : f32 to vector<1x1xf32>
    %21 = vector.broadcast %4 : f32 to vector<1x1xf32>
    %22 = arith.mulf %20, %21 : vector<1x1xf32>
    %23 = vector.shape_cast %6 : vector<4x1xf32> to vector<1x4x1xf32>
    %cst_7 = arith.constant dense<0.000000e+00> : vector<1xf32>
    %24 = vector.multi_reduction <add>, %23, %cst_7 [1, 2] : vector<1x4x1xf32> to vector<1xf32>
    %25 = vector.shape_cast %24 : vector<1xf32> to vector<1x1x1xf32>
    %26 = vector.extract %25[0, 0, 0] : f32 from vector<1x1x1xf32>
    %27 = vector.broadcast %26 : f32 to vector<1x1xf32>
    %28 = vector.broadcast %1 : f32 to vector<1x1xf32>
    %29 = arith.divf %28, %27 : vector<1x1xf32>
    %30 = vector.broadcast %29 : vector<1x1xf32> to vector<1x16xf32>
    %31 = arith.mulf %30, %11 : vector<1x16xf32>
    %32 = vector.broadcast %2 : f32 to vector<4x16xf32>
    %33 = arith.mulf %32, %7 : vector<4x16xf32>
    %34 = vector.broadcast %31 : vector<1x16xf32> to vector<4x16xf32>
    %35 = arith.subf %34, %33 : vector<4x16xf32>
    %cst_8 = arith.constant dense<0.000000e+00> : vector<16x16xf32>
    %36 = tpu.matmul %9, %35, %cst_8 {dimension_numbers = #tpu.dot_dimension_numbers<[0], [0], [1], [1], [0, 1, 1, 1], [], []>} : vector<4x16xf32>, vector<4x16xf32>, vector<16x16xf32> -> vector<16x16xf32>
    %c0_9 = arith.constant 0 : index
    %c0_10 = arith.constant 0 : index
    %37 = vector.load %arg5[%c0_9, %c0_10] : memref<16x16xf32, #tpu.memory_space<vmem>>, vector<16x16xf32>
    %38 = arith.addf %37, %36 : vector<16x16xf32>
    %c0_i32 = arith.constant 0 : i32
    %39 = arith.index_cast %c0_i32 : i32 to index
    %40 = memref.load %arg1[%39] : memref<4xf32, #tpu.memory_space<smem>>
    %41 = arith.index_cast %c0_i32 : i32 to index
    %c0_11 = arith.constant 0 : index
    %c0_12 = arith.constant 0 : index
    %42 = vector.load %arg6[%41, %c0_11, %c0_12] : memref<4x16x16xf32, #tpu.memory_space<vmem>>, vector<1x16x16xf32>
    %43 = vector.shape_cast %42 : vector<1x16x16xf32> to vector<16x16xf32>
    %44 = vector.broadcast %40 : f32 to vector<16x16xf32>
    %45 = arith.mulf %44, %43 : vector<16x16xf32>
    %46 = arith.subf %38, %45 : vector<16x16xf32>
    %c1_i32 = arith.constant 1 : i32
    %47 = arith.index_cast %c1_i32 : i32 to index
    %48 = memref.load %arg1[%47] : memref<4xf32, #tpu.memory_space<smem>>
    %49 = arith.index_cast %c1_i32 : i32 to index
    %c0_13 = arith.constant 0 : index
    %c0_14 = arith.constant 0 : index
    %50 = vector.load %arg6[%49, %c0_13, %c0_14] : memref<4x16x16xf32, #tpu.memory_space<vmem>>, vector<1x16x16xf32>
    %51 = vector.shape_cast %50 : vector<1x16x16xf32> to vector<16x16xf32>
    %52 = vector.broadcast %48 : f32 to vector<16x16xf32>
    %53 = arith.mulf %52, %51 : vector<16x16xf32>
    %54 = arith.subf %46, %53 : vector<16x16xf32>
    %c2_i32 = arith.constant 2 : i32
    %55 = arith.index_cast %c2_i32 : i32 to index
    %56 = memref.load %arg1[%55] : memref<4xf32, #tpu.memory_space<smem>>
    %57 = arith.index_cast %c2_i32 : i32 to index
    %c0_15 = arith.constant 0 : index
    %c0_16 = arith.constant 0 : index
    %58 = vector.load %arg6[%57, %c0_15, %c0_16] : memref<4x16x16xf32, #tpu.memory_space<vmem>>, vector<1x16x16xf32>
    %59 = vector.shape_cast %58 : vector<1x16x16xf32> to vector<16x16xf32>
    %60 = vector.broadcast %56 : f32 to vector<16x16xf32>
    %61 = arith.mulf %60, %59 : vector<16x16xf32>
    %62 = arith.subf %54, %61 : vector<16x16xf32>
    %c3_i32 = arith.constant 3 : i32
    %63 = arith.index_cast %c3_i32 : i32 to index
    %64 = memref.load %arg1[%63] : memref<4xf32, #tpu.memory_space<smem>>
    %65 = arith.index_cast %c3_i32 : i32 to index
    %c0_17 = arith.constant 0 : index
    %c0_18 = arith.constant 0 : index
    %66 = vector.load %arg6[%65, %c0_17, %c0_18] : memref<4x16x16xf32, #tpu.memory_space<vmem>>, vector<1x16x16xf32>
    %67 = vector.shape_cast %66 : vector<1x16x16xf32> to vector<16x16xf32>
    %68 = vector.broadcast %64 : f32 to vector<16x16xf32>
    %69 = arith.mulf %68, %67 : vector<16x16xf32>
    %70 = arith.subf %62, %69 : vector<16x16xf32>
    %c4_i32 = arith.constant 4 : i32
    %71 = arith.mulf %70, %70 : vector<16x16xf32>
    %72 = vector.shape_cast %71 : vector<16x16xf32> to vector<1x16x16xf32>
    %cst_19 = arith.constant dense<0.000000e+00> : vector<1xf32>
    %73 = vector.multi_reduction <add>, %72, %cst_19 [1, 2] : vector<1x16x16xf32> to vector<1xf32>
    %74 = vector.shape_cast %73 : vector<1xf32> to vector<1x1x1xf32>
    %75 = vector.extract %74[0, 0, 0] : f32 from vector<1x1x1xf32>
    %76 = vector.broadcast %75 : f32 to vector<1x1xf32>
    %77 = vector.broadcast %5 : f32 to vector<1x1xf32>
    %78 = arith.mulf %76, %77 : vector<1x1xf32>
    %cst_20 = arith.constant 9.99999997E-7 : f32
    %79 = vector.broadcast %cst_20 : f32 to vector<4x1xf32>
    %80 = arith.addf %6, %79 : vector<4x1xf32>
    %81 = math.log %80 : vector<4x1xf32>
    %82 = vector.shape_cast %81 : vector<4x1xf32> to vector<1x4x1xf32>
    %cst_21 = arith.constant dense<0.000000e+00> : vector<1xf32>
    %83 = vector.multi_reduction <add>, %82, %cst_21 [1, 2] : vector<1x4x1xf32> to vector<1xf32>
    %84 = vector.shape_cast %83 : vector<1xf32> to vector<1x1x1xf32>
    %85 = vector.extract %84[0, 0, 0] : f32 from vector<1x1x1xf32>
    %86 = vector.broadcast %85 : f32 to vector<1x1xf32>
    %87 = vector.broadcast %3 : f32 to vector<1x1xf32>
    %88 = arith.mulf %87, %86 : vector<1x1xf32>
    %cst_22 = arith.constant 1.000000e+00 : f32
    %89 = arith.subf %cst_22, %0 : f32
    %90 = vector.broadcast %89 : f32 to vector<1x1xf32>
    %91 = arith.mulf %90, %22 : vector<1x1xf32>
    %92 = vector.broadcast %0 : f32 to vector<1x1xf32>
    %93 = arith.mulf %92, %78 : vector<1x1xf32>
    %94 = arith.addf %91, %93 : vector<1x1xf32>
    %95 = arith.addf %94, %88 : vector<1x1xf32>
    %c0_23 = arith.constant 0 : index
    %c0_24 = arith.constant 0 : index
    %96 = vector.load %arg7[%c0_23, %c0_24] : memref<1x1xf32, #tpu.memory_space<vmem>>, vector<1x1xf32>
    tpu.vector_store %arg7[%c0_23, %c0_24], %95 {strides = array<i32>} : memref<1x1xf32, #tpu.memory_space<vmem>>, vector<1x1xf32>,
    return
  }
}

</mosaic_0001>

<llo_original>
// kernel: tpu_custom_call.1
$region0: #{tpu_custom_call.1}
  #allocation0 [shape = 'u32[]', space=smem, size = 0x4, offset = 0x4, fixed_abs, tag = 'smem constant byte address 0x4 - core index']
  #allocation1 [shape = 'u32[72,128]{1,0:T(1,128)}', space=vmem, size = 0x9000, scoped, tag = 'internal scratch']
  %s0 = inlined_call_operand.vmem [shape: f32[6], index: 0, kind: input, shape index: {}]
  %s1 = inlined_call_operand.hbm [shape: f32[4], index: 1, kind: input, shape index: {}]
  %s2 = inlined_call_operand.vmem [shape: f32[4,1], index: 2, kind: input, shape index: {}]
  %s3 = inlined_call_operand.hbm [shape: f32[2,16], index: 3, kind: input, shape index: {}]
  %s4 = inlined_call_operand.vmem [shape: f32[4,16], index: 4, kind: input, shape index: {}]
  %s5 = inlined_call_operand.hbm [shape: f32[16,16], index: 5, kind: input, shape index: {}]
  %s6 = inlined_call_operand.hbm [shape: f32[4,16,16], index: 6, kind: input, shape index: {}]
  %s7 = inlined_call_operand.hbm [shape: f32[1,1], index: 7, kind: output, shape index: {}]
  %s8 = sld [smem:[#allocation0]]
  $region58: #{tpu_custom_call.1} parent=0
    _
  %s10 = ssub.s32 1, %s8
  %s11 = scalar_select 0, %s10, %s8
  $region1: #{tpu_custom_call.1} parent=0
    #allocation2 [shape = 'u8[512]{0}', space=smem, size = 0x200, scoped, tag = 'input window, operand 0, single buffered']
    #allocation3 [shape = 's32[1]{0}', space=sflag, size = 0x4, scoped, tag = 'scoped memory for tpu_custom_call.1']
    #allocation4 [shape = 's32[1]{0}', space=sflag, size = 0x4, scoped, tag = 'scoped memory for tpu_custom_call.1']
    #allocation5 [shape = 's32[1]{0}', space=sflag, size = 0x4, scoped, tag = 'scoped memory for tpu_custom_call.1']
    #allocation6 [shape = 's32[1]{0}', space=sflag, size = 0x4, scoped, tag = 'scoped memory for tpu_custom_call.1']
    #allocation7 [shape = 'u8[512]{0}', space=smem, size = 0x200, scoped, tag = 'input window, operand 1, single buffered']
    #allocation8 [shape = 'u8[1024]{0}', space=vmem, size = 0x400, scoped, tag = 'input window, operand 3, single buffered']
    #allocation9 [shape = 'u8[8192]{0}', space=vmem, size = 0x2000, scoped, tag = 'input window, operand 5, single buffered']
    #allocation10 [shape = 's32[1]{0}', space=sflag, size = 0x4, scoped, tag = 'scoped memory for tpu_custom_call.1']
    #allocation11 [shape = 'u8[32768]{0}', space=vmem, size = 0x8000, scoped, tag = 'input window, operand 6, single buffered']
    #allocation12 [shape = 'u8[512]{0}', space=vmem, size = 0x400, scoped, tag = 'output window, operand 0, single buffered']
    %12 = vsyncpa [#allocation6], 0
    %13 = vsyncpa [#allocation5], 0
    %14 = vsyncpa [#allocation3], 0
    %15 = vsyncpa [#allocation10], 0
    %16 = vsyncpa [#allocation4], 0
    // Predicated region
    $region2: #{tpu_custom_call.1} parent=1 // pred_check
      _
    $region3: #{tpu_custom_call.1} parent=1 // pred_check_branch
      %18 = sbr.rel (0) target = $region5
    $region4: #{tpu_custom_call.1} parent=1 // pred_region
      %20 = vsyncadd [#allocation6], 0
      %s22 = sshll.u32 %s0, 4
      %s23 = int_to_ptr.vmem [resolvable:$true] %s22
      %25 = dma.vmem_to_smem %s23, 16, [#allocation2], [#allocation6]
    $region5: #{tpu_custom_call.1} parent=1 // pred_fallthru
      _
    // Predicated region
    $region6: #{tpu_custom_call.1} parent=1 // pred_check
      _
    $region7: #{tpu_custom_call.1} parent=1 // pred_check_branch
      %27 = sbr.rel (0) target = $region9
    $region8: #{tpu_custom_call.1} parent=1 // pred_region
      %29 = vsyncadd [#allocation5], 0
      %s31 = sshll.u32 %s1, 4
      %s32 = int_to_ptr.hbm [resolvable:$true] %s31
      %34 = dma.hbm_to_smem %s32, 16, [#allocation7], [#allocation5]
    $region9: #{tpu_custom_call.1} parent=1 // pred_fallthru
      _
    // Predicated region
    $region10: #{tpu_custom_call.1} parent=1 // pred_check
      _
    $region11: #{tpu_custom_call.1} parent=1 // pred_check_branch
      %36 = sbr.rel (0) target = $region13
    $region12: #{tpu_custom_call.1} parent=1 // pred_region
      _
    $region13: #{tpu_custom_call.1} parent=1 // pred_fallthru
      _
    // Predicated region
    $region14: #{tpu_custom_call.1} parent=1 // pred_check
      _
    $region15: #{tpu_custom_call.1} parent=1 // pred_check_branch
      %38 = sbr.rel (0) target = $region17
    $region16: #{tpu_custom_call.1} parent=1 // pred_region
      %40 = vsyncadd [#allocation3], 0
      %s42 = sshll.u32 %s3, 4
      %s43 = int_to_ptr.hbm [resolvable:$true] %s42
      %s44 = sshll.u32 [#allocation8], 4
      %s45 = int_to_ptr.vmem [resolvable:$true] %s44
      %47 = dma.hbm_to_vmem [thread:$0]  %s43, 32, %s45, [#allocation3]
    $region17: #{tpu_custom_call.1} parent=1 // pred_fallthru
      _
    // Predicated region
    $region18: #{tpu_custom_call.1} parent=1 // pred_check
      _
    $region19: #{tpu_custom_call.1} parent=1 // pred_check_branch
      %49 = sbr.rel (0) target = $region21
    $region20: #{tpu_custom_call.1} parent=1 // pred_region
      _
    $region21: #{tpu_custom_call.1} parent=1 // pred_fallthru
      _
    // Predicated region
    $region22: #{tpu_custom_call.1} parent=1 // pred_check
      _
    $region23: #{tpu_custom_call.1} parent=1 // pred_check_branch
      %51 = sbr.rel (0) target = $region25
    $region24: #{tpu_custom_call.1} parent=1 // pred_region
      %53 = vsyncadd [#allocation10], 0
      %s54 = sshll.u32 %s5, 4
      %s55 = int_to_ptr.hbm [resolvable:$true] %s54
      %s56 = sshll.u32 [#allocation9], 4
      %s57 = int_to_ptr.vmem [resolvable:$true] %s56
      %62 = dma.hbm_to_vmem [thread:$0]  %s55, 256, %s57, [#allocation10], 128, 128, 8
    $region25: #{tpu_custom_call.1} parent=1 // pred_fallthru
      _
    // Predicated region
    $region26: #{tpu_custom_call.1} parent=1 // pred_check
      _
    $region27: #{tpu_custom_call.1} parent=1 // pred_check_branch
      %64 = sbr.rel (0) target = $region29
    $region28: #{tpu_custom_call.1} parent=1 // pred_region
      %66 = vsyncadd [#allocation10], 0
      %s67 = sshll.u32 %s6, 4
      %s68 = int_to_ptr.hbm [resolvable:$true] %s67
      %s69 = sshll.u32 [#allocation11], 4
      %s70 = int_to_ptr.vmem [resolvable:$true] %s69
      %75 = dma.hbm_to_vmem [thread:$0]  %s68, 1024, %s70, [#allocation10], 128, 128, 8
    $region29: #{tpu_custom_call.1} parent=1 // pred_fallthru
      _
    // Predicated region
    $region30: #{tpu_custom_call.1} parent=1 // pred_check
      _
    $region31: #{tpu_custom_call.1} parent=1 // pred_check_branch
      %77 = sbr.rel (0) target = $region33
    $region32: #{tpu_custom_call.1} parent=1 // pred_region
      %79 = dma.done [#allocation6], 16
    $region33: #{tpu_custom_call.1} parent=1 // pred_fallthru
      _
    // Predicated region
    $region34: #{tpu_custom_call.1} parent=1 // pred_check
      _
    $region35: #{tpu_custom_call.1} parent=1 // pred_check_branch
      %81 = sbr.rel (0) target = $region37
    $region36: #{tpu_custom_call.1} parent=1 // pred_region
      %83 = dma.done [#allocation5], 16
    $region37: #{tpu_custom_call.1} parent=1 // pred_fallthru
      _
    // Predicated region
    $region38: #{tpu_custom_call.1} parent=1 // pred_check
      _
    $region39: #{tpu_custom_call.1} parent=1 // pred_check_branch
      %85 = sbr.rel (0) target = $region41
    $region40: #{tpu_custom_call.1} parent=1 // pred_region
      %87 = dma.done [#allocation3], 32
    $region41: #{tpu_custom_call.1} parent=1 // pred_fallthru
      _
    // Predicated region
    $region42: #{tpu_custom_call.1} parent=1 // pred_check
      _
    $region43: #{tpu_custom_call.1} parent=1 // pred_check_branch
      %89 = sbr.rel (0) target = $region45
    $region44: #{tpu_custom_call.1} parent=1 // pred_region
      %91 = dma.done [#allocation10], 256
    $region45: #{tpu_custom_call.1} parent=1 // pred_fallthru
      _
    // Predicated region
    $region46: #{tpu_custom_call.1} parent=1 // pred_check
      _
    $region47: #{tpu_custom_call.1} parent=1 // pred_check_branch
      %93 = sbr.rel (0) target = $region49
    $region48: #{tpu_custom_call.1} parent=1 // pred_region
      %95 = dma.done [#allocation10], 1024
    $region49: #{tpu_custom_call.1} parent=1 // pred_fallthru
      _
    %96 = sfence
    %s97 = sld [smem:[#allocation2]]
    %s98 = sld [smem:[#allocation2 + $0x1]]
    %s99 = sld [smem:[#allocation2 + $0x2]]
    %s100 = sld [smem:[#allocation2 + $0x3]]
    %s101 = sld [smem:[#allocation2 + $0x4]]
    %s102 = sld [smem:[#allocation2 + $0x5]]
    %v103 = vld [vmem:[%s2] sm:$0xf]
    %v104 = vld [vmem:[%s4] sm:$0xf]
    %106 = vset.pattern.permute.xlu0 0
    %107 = vperm.xlu0 %106, %v103
    %v108 = vpop.permute.xlu0 %107
    %v110 = vmul.f32 %v108, %v104
    %vm111 = vcmask 125952
    %v112 = vsel %vm111, %v110, 0.0
    %v113 = vrot.slane %v112, 4
    %v114 = vadd.f32 %v112, %v113
    %v115 = vrot.slane %v114, 2
    %v116 = vadd.f32 %v114, %v115
    %v117 = vrot.slane %v116, 1
    %v118 = vadd.f32 %v116, %v117
    %v119 = vld [vmem:[#allocation8] sm:$0x3]
    %v120 = vsub.f32 %v119, %v118
    %v121 = vmul.f32 %v120, %v120
    %vm122 = vcmask 123904
    %v123 = vsel %vm122, %v121, 0.0
    %124 = vadd.xlane.f32.xlu0 %v123
    %v125 = vpop.xlane.xlu0 %124
    %v126 = vrot.slane %v125, 4
    %v127 = vadd.f32 %v125, %v126
    %v128 = vrot.slane %v127, 2
    %v129 = vadd.f32 %v127, %v128
    %v130 = vrot.slane %v129, 1
    %v131 = vadd.f32 %v129, %v130
    %s132 = vtos %v131
    %v133 = vstv %s132
    %v134 = vstv %s101
    %v135 = vmul.f32 %v133, %v134
    %vm136 = vcmask 3072
    %v137 = vsel %vm136, %v103, 0.0
    %138 = vadd.xlane.f32.xlu0 %v137
    %v139 = vpop.xlane.xlu0 %138
    %v140 = vrot.slane %v139, 4
    %v141 = vadd.f32 %v139, %v140
    %v142 = vrot.slane %v141, 2
    %v143 = vadd.f32 %v141, %v142
    %v144 = vrot.slane %v143, 1
    %v145 = vadd.f32 %v143, %v144
    %s146 = vtos %v145
    %v147 = vstv %s146
    %v148 = vstv %s98
    %v149 = vrcp.pop %v147
    %v150 = vmul.f32 %v147, %v149
    %v151 = vsub.f32 1.0, %v150
    %v152 = vmul.f32 %v149, %v151
    %v153 = vadd.f32 %v149, %v152
    %vm154 = vweird.f32 %v147
    %vm155 = vweird.f32 %v149
    %vm156 = vmor %vm154, %vm155
    %v157 = vsel %vm156, %v149, %v153
    %v158 = vand.u32 2147483647, %v147
    %vm159 = vcmp.eq.f32.partialorder %v158, 8.507059e+37
    %v160 = vand.u32 %v147, 2147483648
    %v161 = vor.u32 1.1754944e-38, %v160
    %v162 = vsel %vm159, %v161, %v157
    %v163 = vmul.f32 %v148, %v162
    %v164 = vmul.f32 %v163, %v118
    %v165 = vstv %s99
    %v166 = vmul.f32 %v165, %v104
    %v167 = vsub.f32 %v164, %v166
    %168 = vxpose.xlu0.b32.start [1/16] %v110, 128
    %169 = vxpose.xlu0.b32.cont [2/16] 0.0, 128
    %170 = vxpose.xlu0.b32.cont [3/16] 0.0, 128
    %171 = vxpose.xlu0.b32.cont [4/16] 0.0, 128
    %172 = vxpose.xlu0.b32.cont [5/16] 0.0, 128
    %173 = vxpose.xlu0.b32.cont [6/16] 0.0, 128
    %174 = vxpose.xlu0.b32.cont [7/16] 0.0, 128
    %175 = vxpose.xlu0.b32.cont [8/16] 0.0, 128
    %176 = vxpose.xlu0.b32.cont [9/16] 0.0, 128
    %177 = vxpose.xlu0.b32.cont [10/16] 0.0, 128
    %178 = vxpose.xlu0.b32.cont [11/16] 0.0, 128
    %179 = vxpose.xlu0.b32.cont [12/16] 0.0, 128
    %180 = vxpose.xlu0.b32.cont [13/16] 0.0, 128
    %181 = vxpose.xlu0.b32.cont [14/16] 0.0, 128
    %182 = vxpose.xlu0.b32.cont [15/16] 0.0, 128
    %183 = vxpose.xlu0.b32.end [16/16] 0.0, 128
    %v184 = vpop.trf.xlu0
    %v185 = vpop.trf.xlu0
    %v186 = vpop.trf.xlu0
    %v187 = vpop.trf.xlu0
    %v188 = vpop.trf.xlu0
    %v189 = vpop.trf.xlu0
    %v190 = vpop.trf.xlu0
    %v191 = vpop.trf.xlu0
    %v192 = vpop.trf.xlu0
    %v193 = vpop.trf.xlu0
    %v194 = vpop.trf.xlu0
    %v195 = vpop.trf.xlu0
    %v196 = vpop.trf.xlu0
    %v197 = vpop.trf.xlu0
    %v198 = vpop.trf.xlu0
    %v199 = vpop.trf.xlu0
    %vm200 = vcmask 31744
    %v202 = vsel %vm200, %v184, 0
    %v205 = vsel %vm200, %v185, 0
    %vm207 = vcmask 1043456
    %v209 = vsel %vm207, %v167, 0
    %211 = vmatpush.msra.mxu0 0.0
    %212 = vmatpush.msra.mxu0 0.0
    %213 = vmatpush.msra.mxu0 0.0
    %214 = vmatpush.msra.mxu0 0.0
    %215 = vmatpush.msra.mxu0 0.0
    %216 = vmatpush.msra.mxu0 0.0
    %217 = vmatpush.msra.mxu0 0.0
    %218 = vmatpush.msra.mxu0 0.0
    %219 = vmatpush.msra.mxu0 0.0
    %220 = vmatpush.msra.mxu0 0.0
    %221 = vmatpush.msra.mxu0 0.0
    %222 = vmatpush.msra.mxu0 0.0
    %223 = vmatpush.msra.mxu0 0.0
    %224 = vmatpush.msra.mxu0 0.0
    %225 = vmatpush.msra.mxu0 0.0
    %226 = vmatpush.msra.mxu0 %v209
    %227 = vmatmul.f32.gmra.mxu0 %v202
    %v228 = vpop.f32.mrf.mxu0
    %v229 = vadd.f32 0.0, %v228
    %230 = vmatmul.f32.gmra.mxu0 %v205
    %v231 = vpop.f32.mrf.mxu0
    %v232 = vadd.f32 0.0, %v231
    %233 = vdwg.mxu0
    %v234 = vld [vmem:[#allocation9] sm:$0xff]
    %v235 = vld [vmem:[#allocation9 + $0x8] sm:$0xff]
    %v236 = vadd.f32 %v234, %v229
    %v237 = vadd.f32 %v235, %v232
    %s238 = sld [smem:[#allocation7]]
    %v239 = vld [vmem:[#allocation11] sm:$0xff]
    %v240 = vld [vmem:[#allocation11 + $0x8] sm:$0xff]
    %v241 = vstv %s238
    %v242 = vmul.f32 %v241, %v239
    %v243 = vmul.f32 %v241, %v240
    %v244 = vsub.f32 %v236, %v242
    %v245 = vsub.f32 %v237, %v243
    %s246 = sld [smem:[#allocation7 + $0x1]]
    %s247 = scalar_lea.vmem [#allocation11], 16
    %v248 = vld [vmem:[%s247] sm:$0xff]
    %v249 = vld [vmem:[%s247 + $0x8] sm:$0xff]
    %v250 = vstv %s246
    %v251 = vmul.f32 %v250, %v248
    %v252 = vmul.f32 %v250, %v249
    %v253 = vsub.f32 %v244, %v251
    %v254 = vsub.f32 %v245, %v252
    %s255 = sld [smem:[#allocation7 + $0x2]]
    %s256 = scalar_lea.vmem [#allocation11], 32
    %v257 = vld [vmem:[%s256] sm:$0xff]
    %v258 = vld [vmem:[%s256 + $0x8] sm:$0xff]
    %v259 = vstv %s255
    %v260 = vmul.f32 %v259, %v257
    %v261 = vmul.f32 %v259, %v258
    %v262 = vsub.f32 %v253, %v260
    %v263 = vsub.f32 %v254, %v261
    %s264 = sld [smem:[#allocation7 + $0x3]]
    %s265 = scalar_lea.vmem [#allocation11], 48
    %v266 = vld [vmem:[%s265] sm:$0xff]
    %v267 = vld [vmem:[%s265 + $0x8] sm:$0xff]
    %v268 = vstv %s264
    %v269 = vmul.f32 %v268, %v266
    %v270 = vmul.f32 %v268, %v267
    %v271 = vsub.f32 %v262, %v269
    %v272 = vsub.f32 %v263, %v270
    %v273 = vmul.f32 %v271, %v271
    %v274 = vmul.f32 %v272, %v272
    %vm275 = vcmask 130048
    %v276 = vsel %vm275, %v273, 0.0
    %v277 = vsel %vm275, %v274, 0.0
    %v278 = vadd.f32 %v276, %v277
    %279 = vadd.xlane.f32.xlu0 %v278
    %v280 = vpop.xlane.xlu0 %279
    %v281 = vrot.slane %v280, 4
    %v282 = vadd.f32 %v280, %v281
    %v283 = vrot.slane %v282, 2
    %v284 = vadd.f32 %v282, %v283
    %v285 = vrot.slane %v284, 1
    %v286 = vadd.f32 %v284, %v285
    %s287 = vtos %v286
    %v288 = vstv %s287
    %v289 = vstv %s102
    %v290 = vmul.f32 %v288, %v289
    %v291 = vadd.f32 %v103, 1e-06
    %v292 = vlog2.pop %v291
    %v293 = vmul.f32 %v292, 0.6931472
    %v294 = vsel %vm136, %v293, 0.0
    %295 = vadd.xlane.f32.xlu0 %v294
    %v296 = vpop.xlane.xlu0 %295
    %v297 = vrot.slane %v296, 4
    %v298 = vadd.f32 %v296, %v297
    %v299 = vrot.slane %v298, 2
    %v300 = vadd.f32 %v298, %v299
    %v301 = vrot.slane %v300, 1
    %v302 = vadd.f32 %v300, %v301
    %s303 = vtos %v302
    %v304 = vstv %s303
    %v305 = vstv %s100
    %v306 = vmul.f32 %v305, %v304
    %s307 = ssub.f32 1.0, %s97
    %v308 = vstv %s307
    %v309 = vmul.f32 %v308, %v135
    %v310 = vstv %s97
    %v311 = vmul.f32 %v310, %v290
    %v312 = vadd.f32 %v309, %v311
    %v313 = vadd.f32 %v312, %v306
    %vm314 = vcmask 0
    %315 = vst.msk [vmem:[#allocation12] sm:$0x1] %vm314, %v313
    // Predicated region
    $region50: #{tpu_custom_call.1} parent=1 // pred_check
      _
    $region51: #{tpu_custom_call.1} parent=1 // pred_check_branch
      %317 = sbr.rel (0) target = $region53
    $region52: #{tpu_custom_call.1} parent=1 // pred_region
      %319 = vsyncadd [#allocation4], 0
      %s321 = sshll.u32 [#allocation12], 4
      %s322 = int_to_ptr.vmem [resolvable:$true] %s321
      %s323 = sshll.u32 %s7, 4
      %s324 = int_to_ptr.hbm [resolvable:$true] %s323
      %326 = dma.vmem_to_hbm [thread:$0]  %s322, 16, %s324, [#allocation4]
    $region53: #{tpu_custom_call.1} parent=1 // pred_fallthru
      _
    // Predicated region
    $region54: #{tpu_custom_call.1} parent=1 // pred_check
      _
    $region55: #{tpu_custom_call.1} parent=1 // pred_check_branch
      %328 = sbr.rel (0) target = $region57
    $region56: #{tpu_custom_call.1} parent=1 // pred_region
      %330 = dma.done [#allocation4], 16
    $region57: #{tpu_custom_call.1} parent=1 // pred_fallthru
      _
    %331 = vsyncpa [#allocation3], 1
    %332 = vsyncpa [#allocation10], 1
    %333 = vsyncpa [#allocation4], 1
    %334 = vsyncpa [#allocation5], 1
    %335 = vsyncpa [#allocation6], 1

</llo_original>
